<compile_context>
chip_gen: v7x
topology: tpu7x:2x2x1
jax: 0.10.0
libtpu: 0.0.40
codegen_flags: <defaults>
</compile_context>

<pallas_src>
import functools

import jax
import jax.numpy as jnp
from jax.experimental import pallas as pl
from jax.experimental.pallas import tpu as pltpu


# ----------------------------------------------------------------------------
# helpers
# ----------------------------------------------------------------------------
def _round_up(a, m):
    return ((a + m - 1) // m) * m


def _pad_rows(a, n_to, fill=0):
    pad = n_to - a.shape[0]
    if pad == 0:
        return a
    return jnp.concatenate(
        [a, jnp.full((pad,) + a.shape[1:], fill, a.dtype)], axis=0)


def _pad_cols(a, cols):
    return jnp.pad(a, ((0, 0), (0, cols - a.shape[1])))


def _tensorcores_per_chip():
    """Best-effort TensorCore count (2 on v7x, 1 on v5e/v6e). Falls back to 1."""
    try:
        info = pltpu.get_tpu_info()
    except Exception:
        return 1
    for name in ("num_cores", "core_count", "tensorcore_count", "num_tensorcores"):
        v = getattr(info, name, None)
        if isinstance(v, int) and v >= 1:
            return v
    return 1


def _tile_graph_ranges(bid_flat, num_tiles, tile, num_graphs):
    """Per-tile [min, max] graph id; padding rows carry id -1 and are ignored."""
    b2 = bid_flat.reshape(num_tiles, tile)
    hi = jnp.max(b2, axis=1).astype(jnp.int32)
    lo = jnp.min(jnp.where(b2 < 0, num_graphs, b2), axis=1).astype(jnp.int32)
    return lo, hi


# ----------------------------------------------------------------------------
# Kernel 1: fused MLP + per-graph global max pool (accumulated across row tiles)
# ----------------------------------------------------------------------------
def _mlp_pool_kernel(glo_ref, ghi_ref,                      # scalar-prefetch (SMEM)
                     xp_ref, bid_ref,
                     w1_ref, b1_ref, w2_ref, b2_ref, w3_ref, b3_ref,
                     pooled_ref, *, num_graphs, steps):
    # Init the (B, H3p) running-max accumulator on the first reduction step.
    @pl.when(pl.program_id(1) == 0)
    def _():
        pooled_ref[...] = jnp.full(pooled_ref.shape, -jnp.inf, pooled_ref.dtype)

    # ---- MLP: bf16 MXU operands, f32 accumulation / bias / ReLU ----
    h = jnp.dot(xp_ref[...], w1_ref[...], preferred_element_type=jnp.float32)
    h = jnp.maximum(h + b1_ref[...], 0.0)
    h = jnp.dot(h.astype(jnp.bfloat16), w2_ref[...],
                preferred_element_type=jnp.float32)
    h = jnp.maximum(h + b2_ref[...], 0.0)
    h = jnp.dot(h.astype(jnp.bfloat16), w3_ref[...],
                preferred_element_type=jnp.float32)
    h = h + b3_ref[...]                                     # (tile, H3p) f32

    # ---- per-graph max over this tile's rows (gated: only graphs in the tile) ----
    t = pl.program_id(0) * steps + pl.program_id(1)
    lo = glo_ref[t]
    hi = ghi_ref[t]
    bid = bid_ref[...]                                      # (tile, 1) int32, padding = -1
    neg_inf = jnp.float32(-jnp.inf)
    for g in range(num_graphs):
        @pl.when(jnp.logical_and(lo <= g, g <= hi))
        def _(g=g):
            masked = jnp.where(bid == g, h, neg_inf)        # exact mask
            part = jnp.max(masked, axis=0, keepdims=True)   # (1, H3p)
            pooled_ref[g:g + 1, :] = jnp.maximum(pooled_ref[g:g + 1, :], part)


# ----------------------------------------------------------------------------
# Kernel 2: interp = pooled[batch_skip]  (knn_interpolate degenerates to a
#           per-graph broadcast) fused with the final cat([interp, x_skip], 1)
# ----------------------------------------------------------------------------
def _interp_concat_kernel(slo_ref, shi_ref,                 # scalar-prefetch (SMEM)
                          bid_ref, xs_ref, pooled_ref,
                          out_ref, *, num_graphs, h_feat):
    t = pl.program_id(0)
    lo = slo_ref[t]
    hi = shi_ref[t]
    bid = bid_ref[...]                                      # (tile_s, 1) int32

    out_ref[:, :h_feat] = jnp.zeros((bid.shape[0], h_feat), jnp.float32)
    for g in range(num_graphs):
        @pl.when(jnp.logical_and(lo <= g, g <= hi))
        def _(g=g):
            row = pooled_ref[g:g + 1, :h_feat]              # (1, h_feat)
            out_ref[:, :h_feat] = jnp.where(bid == g, row, out_ref[:, :h_feat])

    # fused concat with x_skip (written into the trailing lanes of the same block)
    out_ref[:, h_feat:] = xs_ref[...]


# ----------------------------------------------------------------------------
# Wrapper
# ----------------------------------------------------------------------------
def global_sa_module(x, pos, batch, x_skip, pos_skip, batch_skip, params,
                     *, num_graphs, tile_n=2048, tile_s=2048):
    w1, b1, w2, b2, w3, b3 = params
    n, c_in = x.shape
    n_skip, c_skip = x_skip.shape
    p_dim = pos.shape[1]
    c_cat = c_in + p_dim
    h1, h2, h3 = w1.shape[1], w2.shape[1], w3.shape[1]
    B = num_graphs

    # ---- parameters: bf16 MXU weights, f32 biases; only the last layer's output
    #      padded to 128 lanes (keeps the pooled tensor lane-dense) ----
    H3p = _round_up(h3, 128)
    w1_p = w1.astype(jnp.bfloat16)                                       # (c_cat, h1)
    w2_p = w2.astype(jnp.bfloat16)                                       # (h1, h2)
    w3_p = _pad_cols(w3.astype(jnp.float32), H3p).astype(jnp.bfloat16)   # (h2, H3p)
    b1_p = b1.reshape(1, h1).astype(jnp.float32)
    b2_p = b2.reshape(1, h2).astype(jnp.float32)
    b3_p = _pad_cols(b3.reshape(1, h3).astype(jnp.float32), H3p)

    # ---- kernel 1: row tiling (+ optional 2-way TensorCore split on v7x) ----
    tile = min(tile_n, max(8, _round_up(n, 8)))
    cores = _tensorcores_per_chip()
    num_splits = 2 if (cores >= 2 and n >= 2 * tile) else 1
    n_pad = _round_up(n, tile * num_splits)
    steps = n_pad // (tile * num_splits)
    num_tiles = num_splits * steps

    xp = jnp.concatenate([x.astype(jnp.float32), pos.astype(jnp.float32)], axis=1)
    xp_p = _pad_rows(xp, n_pad).astype(jnp.bfloat16)                     # (n_pad, c_cat)
    bid_p = _pad_rows(batch.astype(jnp.int32).reshape(-1, 1), n_pad, fill=-1)
    glo, ghi = _tile_graph_ranges(bid_p[:, 0], num_tiles, tile, B)

    row_map = lambda p, i, lo, hi: (p * steps + i, 0)
    const_map = lambda p, i, lo, hi: (0, 0)

    pooled_parts = pl.pallas_call(
        functools.partial(_mlp_pool_kernel, num_graphs=B, steps=steps),
        out_shape=jax.ShapeDtypeStruct((num_splits, B, H3p), jnp.float32),
        grid_spec=pltpu.PrefetchScalarGridSpec(
            num_scalar_prefetch=2,
            grid=(num_splits, steps),
            in_specs=[
                pl.BlockSpec((tile, c_cat), row_map),
                pl.BlockSpec((tile, 1), row_map),
                pl.BlockSpec((c_cat, h1), const_map),
                pl.BlockSpec((1, h1), const_map),
                pl.BlockSpec((h1, h2), const_map),
                pl.BlockSpec((1, h2), const_map),
                pl.BlockSpec((h2, H3p), const_map),
                pl.BlockSpec((1, H3p), const_map),
            ],
            out_specs=pl.BlockSpec((None, B, H3p), lambda p, i, lo, hi: (p, 0, 0)),
        ),
        compiler_params=pltpu.CompilerParams(
            dimension_semantics=("parallel", "arbitrary"),
            vmem_limit_bytes=32 * 1024 * 1024),
    )(glo, ghi, xp_p, bid_p, w1_p, b1_p, w2_p, b2_p, w3_p, b3_p)

    pooled = pooled_parts[0] if num_splits == 1 else jnp.max(pooled_parts, axis=0)
    # NOTE: graphs with zero points stay at -inf here (reference behaviour undefined).

    # ---- kernel 2: per-graph broadcast + fused concat with x_skip ----
    tile_s_eff = min(tile_s, max(8, _round_up(n_skip, 8)))
    ns_pad = _round_up(n_skip, tile_s_eff)
    tiles_s = ns_pad // tile_s_eff

    bsk_p = _pad_rows(batch_skip.astype(jnp.int32).reshape(-1, 1), ns_pad, fill=-1)
    xs_p = _pad_rows(x_skip.astype(jnp.float32), ns_pad)
    slo, shi = _tile_graph_ranges(bsk_p[:, 0], tiles_s, tile_s_eff, B)

    c_out = h3 + c_skip
    out_pad = pl.pallas_call(
        functools.partial(_interp_concat_kernel, num_graphs=B, h_feat=h3),
        out_shape=jax.ShapeDtypeStruct((ns_pad, c_out), jnp.float32),
        grid_spec=pltpu.PrefetchScalarGridSpec(
            num_scalar_prefetch=2,
            grid=(tiles_s,),
            in_specs=[
                pl.BlockSpec((tile_s_eff, 1), lambda i, lo, hi: (i, 0)),
                pl.BlockSpec((tile_s_eff, c_skip), lambda i, lo, hi: (i, 0)),
                pl.BlockSpec((B, H3p), lambda i, lo, hi: (0, 0)),
            ],
            out_specs=pl.BlockSpec((tile_s_eff, c_out), lambda i, lo, hi: (i, 0)),
        ),
        compiler_params=pltpu.CompilerParams(
            dimension_semantics=("parallel",),
            vmem_limit_bytes=32 * 1024 * 1024),
    )(slo, shi, bsk_p, xs_p, pooled)

    out = out_pad if ns_pad == n_skip else out_pad[:n_skip]
    # knn_interpolate reassigns pos/batch to the skip versions before returning.
    return out, pos_skip, batch_skip


# ----------------------------------------------------------------------------
# Deterministic parameter init for the inner MLP ([C+3, 32, 64, 64])
# ----------------------------------------------------------------------------
def init_mlp_params(key, c_cat, h1, h2, h3):
    k1, k2, k3 = jax.random.split(key, 3)
    def lin(k, fan_in, fan_out):
        scale = 1.0 / jnp.sqrt(fan_in)
        w = jax.random.uniform(k, (fan_in, fan_out), jnp.float32, -scale, scale)
        b = jnp.zeros((fan_out,), jnp.float32)
        return w, b
    w1, b1 = lin(k1, c_cat, h1)
    w2, b2 = lin(k2, h1, h2)
    w3, b3 = lin(k3, h2, h3)
    return (w1, b1, w2, b2, w3, b3)


if __name__ == "__main__":
    key = jax.random.PRNGKey(0)
    kx, kp, kxs, kps, kw = jax.random.split(key, 5)

    # Small synthetic point cloud: B=2 graphs, 64 coarse points, 64 skip points.
    B = 2
    N, N_SKIP = 64, 64
    C_IN, C_SKIP = 16, 16
    H1, H2, H3 = 32, 64, 64

    x = jax.random.normal(kx, (N, C_IN), jnp.float32)
    pos = jax.random.normal(kp, (N, 3), jnp.float32)
    batch = jnp.repeat(jnp.arange(B, dtype=jnp.int32), N // B)

    x_skip = jax.random.normal(kxs, (N_SKIP, C_SKIP), jnp.float32)
    pos_skip = jax.random.normal(kps, (N_SKIP, 3), jnp.float32)
    batch_skip = jnp.repeat(jnp.arange(B, dtype=jnp.int32), N_SKIP // B)

    params = init_mlp_params(kw, C_IN + 3, H1, H2, H3)

    out, pos_out, batch_out = global_sa_module(
        x, pos, batch, x_skip, pos_skip, batch_skip, params, num_graphs=B)
    jax.block_until_ready(out)

    # shape / sanity checks
    assert out.shape == (N_SKIP, H3 + C_SKIP)
    assert pos_out.shape == (N_SKIP, 3)
    assert batch_out.shape == (N_SKIP,)
    assert bool(jnp.all(jnp.isfinite(out)))

    # pure-JAX f32 reference (loose tolerance: kernel uses bf16 MXU operands)
    w1, b1, w2, b2, w3, b3 = params
    h_ref = jnp.maximum(jnp.concatenate([x, pos], axis=1) @ w1 + b1, 0.0)
    h_ref = jnp.maximum(h_ref @ w2 + b2, 0.0)
    h_ref = h_ref @ w3 + b3
    pooled_ref = jax.ops.segment_max(h_ref, batch, num_segments=B)
    ref = jnp.concatenate([pooled_ref[batch_skip], x_skip], axis=1)
    assert bool(jnp.allclose(out, ref, atol=5e-2, rtol=5e-2))

    print("KERNEL_OK")
</pallas_src>

<mosaic_0001>
module attributes {stable_mosaic.version = 11 : i64} {
  func.func @_mlp_pool_kernel(%arg0: i32, %arg1: i32, %arg2: memref<1xi32, #tpu.memory_space<smem>>, %arg3: memref<1xi32, #tpu.memory_space<smem>>, %arg4: memref<64x19xbf16, #tpu.memory_space<vmem>>, %arg5: memref<64x1xi32, #tpu.memory_space<vmem>>, %arg6: memref<19x32xbf16, #tpu.memory_space<vmem>>, %arg7: memref<1x32xf32, #tpu.memory_space<vmem>>, %arg8: memref<32x64xbf16, #tpu.memory_space<vmem>>, %arg9: memref<1x64xf32, #tpu.memory_space<vmem>>, %arg10: memref<64x128xbf16, #tpu.memory_space<vmem>>, %arg11: memref<1x128xf32, #tpu.memory_space<vmem>>, %arg12: memref<1x2x128xf32, #tpu.memory_space<vmem>>) attributes {dimension_semantics = [#tpu.dimension_semantics<parallel>, #tpu.dimension_semantics<arbitrary>], iteration_bounds = array<i64: 1, 1>, scalar_prefetch = 2 : i64, scratch_operands = 0 : i64, tpu.core_type = #tpu.core_type<tc>, window_params = [{transform_indices = @transform_0, window_bounds = array<i64: 64, 19>}, {transform_indices = @transform_1, window_bounds = array<i64: 64, 1>}, {pipeline_mode = #tpu.pipeline_mode<synchronous>, transform_indices = @transform_2, window_bounds = array<i64: 19, 32>}, {pipeline_mode = #tpu.pipeline_mode<synchronous>, transform_indices = @transform_3, window_bounds = array<i64: 1, 32>}, {pipeline_mode = #tpu.pipeline_mode<synchronous>, transform_indices = @transform_4, window_bounds = array<i64: 32, 64>}, {pipeline_mode = #tpu.pipeline_mode<synchronous>, transform_indices = @transform_5, window_bounds = array<i64: 1, 64>}, {pipeline_mode = #tpu.pipeline_mode<synchronous>, transform_indices = @transform_6, window_bounds = array<i64: 64, 128>}, {pipeline_mode = #tpu.pipeline_mode<synchronous>, transform_indices = @transform_7, window_bounds = array<i64: 1, 128>}, {transform_indices = @transform_8, window_bounds = array<i64: 1, 2, 128>}]} {
    %c0_i32 = arith.constant 0 : i32
    %0 = arith.cmpi eq, %arg1, %c0_i32 : i32
    %1 = arith.extui %0 : i1 to i32
    %c0_i32_0 = arith.constant 0 : i32
    %2 = arith.cmpi ne, %1, %c0_i32_0 : i32
    scf.if %2 {
      %cst_28 = arith.constant 0xFF800000 : f32
      %42 = vector.broadcast %cst_28 : f32 to vector<2x128xf32>
      %c0_29 = arith.constant 0 : index
      %c0_30 = arith.constant 0 : index
      %c0_31 = arith.constant 0 : index
      %43 = vector.load %arg12[%c0_29, %c0_30, %c0_31] : memref<1x2x128xf32, #tpu.memory_space<vmem>>, vector<1x2x128xf32>
      %44 = vector.shape_cast %43 : vector<1x2x128xf32> to vector<2x128xf32>
      %45 = vector.shape_cast %42 : vector<2x128xf32> to vector<1x2x128xf32>
      tpu.vector_store %arg12[%c0_29, %c0_30, %c0_31], %45 {strides = array<i32>} : memref<1x2x128xf32, #tpu.memory_space<vmem>>, vector<1x2x128xf32>,
    } else {
    }
    %c0 = arith.constant 0 : index
    %c0_1 = arith.constant 0 : index
    %3 = vector.load %arg4[%c0, %c0_1] : memref<64x19xbf16, #tpu.memory_space<vmem>>, vector<64x19xbf16>
    %c0_2 = arith.constant 0 : index
    %c0_3 = arith.constant 0 : index
    %4 = vector.load %arg6[%c0_2, %c0_3] : memref<19x32xbf16, #tpu.memory_space<vmem>>, vector<19x32xbf16>
    %cst = arith.constant dense<0.000000e+00> : vector<64x32xf32>
    %5 = tpu.matmul %3, %4, %cst {dimension_numbers = #tpu.dot_dimension_numbers<[1], [0], [0], [1], [0, 0, 1, 1], [], []>} : vector<64x19xbf16>, vector<19x32xbf16>, vector<64x32xf32> -> vector<64x32xf32>
    %c0_4 = arith.constant 0 : index
    %c0_5 = arith.constant 0 : index
    %6 = vector.load %arg7[%c0_4, %c0_5] : memref<1x32xf32, #tpu.memory_space<vmem>>, vector<1x32xf32>
    %7 = vector.broadcast %6 : vector<1x32xf32> to vector<64x32xf32>
    %8 = arith.addf %5, %7 : vector<64x32xf32>
    %cst_6 = arith.constant 0.000000e+00 : f32
    %9 = vector.broadcast %cst_6 : f32 to vector<64x32xf32>
    %10 = arith.maximumf %8, %9 : vector<64x32xf32>
    %11 = arith.truncf %10 : vector<64x32xf32> to vector<64x32xbf16>
    %c0_7 = arith.constant 0 : index
    %c0_8 = arith.constant 0 : index
    %12 = vector.load %arg8[%c0_7, %c0_8] : memref<32x64xbf16, #tpu.memory_space<vmem>>, vector<32x64xbf16>
    %cst_9 = arith.constant dense<0.000000e+00> : vector<64x64xf32>
    %13 = tpu.matmul %11, %12, %cst_9 {dimension_numbers = #tpu.dot_dimension_numbers<[1], [0], [0], [1], [0, 0, 1, 1], [], []>} : vector<64x32xbf16>, vector<32x64xbf16>, vector<64x64xf32> -> vector<64x64xf32>
    %c0_10 = arith.constant 0 : index
    %c0_11 = arith.constant 0 : index
    %14 = vector.load %arg9[%c0_10, %c0_11] : memref<1x64xf32, #tpu.memory_space<vmem>>, vector<1x64xf32>
    %15 = vector.broadcast %14 : vector<1x64xf32> to vector<64x64xf32>
    %16 = arith.addf %13, %15 : vector<64x64xf32>
    %cst_12 = arith.constant 0.000000e+00 : f32
    %17 = vector.broadcast %cst_12 : f32 to vector<64x64xf32>
    %18 = arith.maximumf %16, %17 : vector<64x64xf32>
    %19 = arith.truncf %18 : vector<64x64xf32> to vector<64x64xbf16>
    %c0_13 = arith.constant 0 : index
    %c0_14 = arith.constant 0 : index
    %20 = vector.load %arg10[%c0_13, %c0_14] : memref<64x128xbf16, #tpu.memory_space<vmem>>, vector<64x128xbf16>
    %cst_15 = arith.constant dense<0.000000e+00> : vector<64x128xf32>
    %21 = tpu.matmul %19, %20, %cst_15 {dimension_numbers = #tpu.dot_dimension_numbers<[1], [0], [0], [1], [0, 0, 1, 1], [], []>} : vector<64x64xbf16>, vector<64x128xbf16>, vector<64x128xf32> -> vector<64x128xf32>
    %c0_16 = arith.constant 0 : index
    %c0_17 = arith.constant 0 : index
    %22 = vector.load %arg11[%c0_16, %c0_17] : memref<1x128xf32, #tpu.memory_space<vmem>>, vector<1x128xf32>
    %23 = vector.broadcast %22 : vector<1x128xf32> to vector<64x128xf32>
    %24 = arith.addf %21, %23 : vector<64x128xf32>
    %c1_i32 = arith.constant 1 : i32
    %25 = arith.muli %arg0, %c1_i32 : i32
    %26 = arith.addi %25, %arg1 : i32
    %27 = arith.index_cast %26 : i32 to index
    %28 = memref.load %arg2[%27] : memref<1xi32, #tpu.memory_space<smem>>
    %29 = arith.index_cast %26 : i32 to index
    %30 = memref.load %arg3[%29] : memref<1xi32, #tpu.memory_space<smem>>
    %c0_18 = arith.constant 0 : index
    %c0_19 = arith.constant 0 : index
    %31 = vector.load %arg5[%c0_18, %c0_19] : memref<64x1xi32, #tpu.memory_space<vmem>>, vector<64x1xi32>
    %c0_i32_20 = arith.constant 0 : i32
    %32 = arith.cmpi sle, %28, %c0_i32_20 : i32
    %c0_i32_21 = arith.constant 0 : i32
    %33 = arith.cmpi sge, %30, %c0_i32_21 : i32
    %34 = arith.andi %32, %33 : i1
    %35 = arith.extui %34 : i1 to i32
    %cst_22 = arith.constant 0xFF800000 : f32
    %c0_i32_23 = arith.constant 0 : i32
    %36 = arith.cmpi ne, %35, %c0_i32_23 : i32
    scf.if %36 {
      %c0_i32_28 = arith.constant 0 : i32
      %42 = vector.broadcast %c0_i32_28 : i32 to vector<64x1xi32>
      %43 = arith.cmpi eq, %31, %42 : vector<64x1xi32>
      %44 = vector.shape_cast %43 : vector<64x1xi1> to vector<64x1xi1>
      %45 = vector.broadcast %44 : vector<64x1xi1> to vector<64x128xi1>
      %46 = vector.broadcast %cst_22 : f32 to vector<64x128xf32>
      %47 = arith.select %45, %24, %46 : vector<64x128xi1>, vector<64x128xf32>
      %cst_29 = arith.constant dense<0xFF800000> : vector<128xf32>
      %48 = vector.multi_reduction <maximumf>, %47, %cst_29 [0] : vector<64x128xf32> to vector<128xf32>
      %49 = vector.shape_cast %48 : vector<128xf32> to vector<1x128xf32>
      %c0_30 = arith.constant 0 : index
      %c0_31 = arith.constant 0 : index
      %c0_32 = arith.constant 0 : index
      %50 = vector.load %arg12[%c0_30, %c0_31, %c0_32] : memref<1x2x128xf32, #tpu.memory_space<vmem>>, vector<1x1x128xf32>
      %51 = vector.shape_cast %50 : vector<1x1x128xf32> to vector<1x128xf32>
      %52 = arith.maximumf %51, %49 : vector<1x128xf32>
      %c0_33 = arith.constant 0 : index
      %c0_34 = arith.constant 0 : index
      %c0_35 = arith.constant 0 : index
      %53 = vector.load %arg12[%c0_33, %c0_34, %c0_35] : memref<1x2x128xf32, #tpu.memory_space<vmem>>, vector<1x1x128xf32>
      %54 = vector.shape_cast %53 : vector<1x1x128xf32> to vector<1x128xf32>
      %55 = vector.shape_cast %52 : vector<1x128xf32> to vector<1x1x128xf32>
      tpu.vector_store %arg12[%c0_33, %c0_34, %c0_35], %55 {strides = array<i32>} : memref<1x2x128xf32, #tpu.memory_space<vmem>>, vector<1x1x128xf32>,
    } else {
    }
    %c1_i32_24 = arith.constant 1 : i32
    %37 = arith.cmpi sle, %28, %c1_i32_24 : i32
    %c1_i32_25 = arith.constant 1 : i32
    %38 = arith.cmpi sge, %30, %c1_i32_25 : i32
    %39 = arith.andi %37, %38 : i1
    %40 = arith.extui %39 : i1 to i32
    %cst_26 = arith.constant 0xFF800000 : f32
    %c0_i32_27 = arith.constant 0 : i32
    %41 = arith.cmpi ne, %40, %c0_i32_27 : i32
    scf.if %41 {
      %c1_i32_28 = arith.constant 1 : i32
      %42 = vector.broadcast %c1_i32_28 : i32 to vector<64x1xi32>
      %43 = arith.cmpi eq, %31, %42 : vector<64x1xi32>
      %44 = vector.shape_cast %43 : vector<64x1xi1> to vector<64x1xi1>
      %45 = vector.broadcast %44 : vector<64x1xi1> to vector<64x128xi1>
      %46 = vector.broadcast %cst_26 : f32 to vector<64x128xf32>
      %47 = arith.select %45, %24, %46 : vector<64x128xi1>, vector<64x128xf32>
      %cst_29 = arith.constant dense<0xFF800000> : vector<128xf32>
      %48 = vector.multi_reduction <maximumf>, %47, %cst_29 [0] : vector<64x128xf32> to vector<128xf32>
      %49 = vector.shape_cast %48 : vector<128xf32> to vector<1x128xf32>
      %c0_30 = arith.constant 0 : index
      %c1 = arith.constant 1 : index
      %c0_31 = arith.constant 0 : index
      %50 = vector.load %arg12[%c0_30, %c1, %c0_31] : memref<1x2x128xf32, #tpu.memory_space<vmem>>, vector<1x1x128xf32>
      %51 = vector.shape_cast %50 : vector<1x1x128xf32> to vector<1x128xf32>
      %52 = arith.maximumf %51, %49 : vector<1x128xf32>
      %c0_32 = arith.constant 0 : index
      %c1_33 = arith.constant 1 : index
      %c0_34 = arith.constant 0 : index
      %53 = vector.load %arg12[%c0_32, %c1_33, %c0_34] : memref<1x2x128xf32, #tpu.memory_space<vmem>>, vector<1x1x128xf32>
      %54 = vector.shape_cast %53 : vector<1x1x128xf32> to vector<1x128xf32>
      %55 = vector.shape_cast %52 : vector<1x128xf32> to vector<1x1x128xf32>
      tpu.vector_store %arg12[%c0_32, %c1_33, %c0_34], %55 {strides = array<i32>} : memref<1x2x128xf32, #tpu.memory_space<vmem>>, vector<1x1x128xf32>,
    } else {
    }
    return
  }
  func.func @transform_0(%arg0: i32, %arg1: i32, %arg2: memref<1xi32, #tpu.memory_space<smem>>, %arg3: memref<1xi32, #tpu.memory_space<smem>>) -> (i32, i32) {
    %c1_i32 = arith.constant 1 : i32
    %0 = arith.muli %arg0, %c1_i32 : i32
    %1 = arith.addi %0, %arg1 : i32
    %c0_i32 = arith.constant 0 : i32
    %c0_i32_0 = arith.constant 0 : i32
    return %1, %c0_i32 : i32, i32
  }
  func.func @transform_1(%arg0: i32, %arg1: i32, %arg2: memref<1xi32, #tpu.memory_space<smem>>, %arg3: memref<1xi32, #tpu.memory_space<smem>>) -> (i32, i32) {
    %c1_i32 = arith.constant 1 : i32
    %0 = arith.muli %arg0, %c1_i32 : i32
    %1 = arith.addi %0, %arg1 : i32
    %c0_i32 = arith.constant 0 : i32
    %c0_i32_0 = arith.constant 0 : i32
    return %1, %c0_i32 : i32, i32
  }
  func.func @transform_2(%arg0: i32, %arg1: i32, %arg2: memref<1xi32, #tpu.memory_space<smem>>, %arg3: memref<1xi32, #tpu.memory_space<smem>>) -> (i32, i32) {
    %c0_i32 = arith.constant 0 : i32
    %c0_i32_0 = arith.constant 0 : i32
    %c0_i32_1 = arith.constant 0 : i32
    return %c0_i32, %c0_i32_0 : i32, i32
  }
  func.func @transform_3(%arg0: i32, %arg1: i32, %arg2: memref<1xi32, #tpu.memory_space<smem>>, %arg3: memref<1xi32, #tpu.memory_space<smem>>) -> (i32, i32) {
    %c0_i32 = arith.constant 0 : i32
    %c0_i32_0 = arith.constant 0 : i32
    %c0_i32_1 = arith.constant 0 : i32
    return %c0_i32, %c0_i32_0 : i32, i32
  }
  func.func @transform_4(%arg0: i32, %arg1: i32, %arg2: memref<1xi32, #tpu.memory_space<smem>>, %arg3: memref<1xi32, #tpu.memory_space<smem>>) -> (i32, i32) {
    %c0_i32 = arith.constant 0 : i32
    %c0_i32_0 = arith.constant 0 : i32
    %c0_i32_1 = arith.constant 0 : i32
    return %c0_i32, %c0_i32_0 : i32, i32
  }
  func.func @transform_5(%arg0: i32, %arg1: i32, %arg2: memref<1xi32, #tpu.memory_space<smem>>, %arg3: memref<1xi32, #tpu.memory_space<smem>>) -> (i32, i32) {
    %c0_i32 = arith.constant 0 : i32
    %c0_i32_0 = arith.constant 0 : i32
    %c0_i32_1 = arith.constant 0 : i32
    return %c0_i32, %c0_i32_0 : i32, i32
  }
  func.func @transform_6(%arg0: i32, %arg1: i32, %arg2: memref<1xi32, #tpu.memory_space<smem>>, %arg3: memref<1xi32, #tpu.memory_space<smem>>) -> (i32, i32) {
    %c0_i32 = arith.constant 0 : i32
    %c0_i32_0 = arith.constant 0 : i32
    %c0_i32_1 = arith.constant 0 : i32
    return %c0_i32, %c0_i32_0 : i32, i32
  }
  func.func @transform_7(%arg0: i32, %arg1: i32, %arg2: memref<1xi32, #tpu.memory_space<smem>>, %arg3: memref<1xi32, #tpu.memory_space<smem>>) -> (i32, i32) {
    %c0_i32 = arith.constant 0 : i32
    %c0_i32_0 = arith.constant 0 : i32
    %c0_i32_1 = arith.constant 0 : i32
    return %c0_i32, %c0_i32_0 : i32, i32
  }
  func.func @transform_8(%arg0: i32, %arg1: i32, %arg2: memref<1xi32, #tpu.memory_space<smem>>, %arg3: memref<1xi32, #tpu.memory_space<smem>>) -> (i32, i32, i32) {
    %c0_i32 = arith.constant 0 : i32
    %c0_i32_0 = arith.constant 0 : i32
    %c0_i32_1 = arith.constant 0 : i32
    return %arg0, %c0_i32, %c0_i32_0 : i32, i32, i32
  }
}

</mosaic_0001>

<llo_original>
// kernel: tpu_custom_call.1
$region0: #{tpu_custom_call.1}
  #allocation0 [shape = 'u32[]', space=smem, size = 0x4, offset = 0x4, fixed_abs, tag = 'smem constant byte address 0x4 - core index']
  #allocation1 [shape = 'u32[144,128]{1,0:T(1,128)}', space=vmem, size = 0x12000, scoped, tag = 'internal scratch']
  #allocation2 [shape = 's32[1]{0}', space=sflag, size = 0x4, scoped, tag = 'scoped memory for tpu_custom_call.1']
  #allocation3 [shape = 's32[1]{0:T(128)S(6)}', space=smem, size = 0x200, scoped, tag = 'prefetched SMEM operand 0']
  #allocation4 [shape = 's32[1]{0:T(128)S(6)}', space=smem, size = 0x200, scoped, tag = 'prefetched SMEM operand 1']
  %s0 = inlined_call_operand.<no memory space> [shape: s32[1], index: 0, kind: input, shape index: {}]
  %s1 = inlined_call_operand.<no memory space> [shape: s32[1], index: 1, kind: input, shape index: {}]
  %s2 = inlined_call_operand.vmem [shape: bf16[64,19], index: 2, kind: input, shape index: {}]
  %s3 = inlined_call_operand.vmem [shape: s32[64,1], index: 3, kind: input, shape index: {}]
  %s4 = inlined_call_operand.vmem [shape: bf16[19,32], index: 4, kind: input, shape index: {}]
  %s5 = inlined_call_operand.vmem [shape: f32[1,32], index: 5, kind: input, shape index: {}]
  %s6 = inlined_call_operand.vmem [shape: bf16[32,64], index: 6, kind: input, shape index: {}]
  %s7 = inlined_call_operand.vmem [shape: f32[1,64], index: 7, kind: input, shape index: {}]
  %s8 = inlined_call_operand.vmem [shape: bf16[64,128], index: 8, kind: input, shape index: {}]
  %s9 = inlined_call_operand.vmem [shape: f32[1,128], index: 9, kind: input, shape index: {}]
  %s10 = inlined_call_operand.hbm [shape: f32[1,2,128], index: 10, kind: output, shape index: {}]
  %s11 = sld [smem:[#allocation0]]
  $region54: #{tpu_custom_call.1} parent=0
    _
  %s13 = ssub.s32 1, %s11
  %s14 = scalar_select 0, %s13, %s11
  %15 = sst [smem:[#allocation3]] %s0
  %16 = sst [smem:[#allocation4]] %s1
  $region1: #{tpu_custom_call.1} parent=0
    #allocation5 [shape = 'u8[1024]{0}', space=vmem, size = 0x400, scoped, tag = 'output window, operand 0, single buffered']
    #allocation6 [shape = 's32[1]{0}', space=sflag, size = 0x4, scoped, tag = 'scoped memory for tpu_custom_call.1']
    %17 = vsyncpa [#allocation6], 0
    // Predicated region
    $region2: #{tpu_custom_call.1} parent=1 // pred_check
      _
    $region3: #{tpu_custom_call.1} parent=1 // pred_check_branch
      %19 = sbr.rel (0) target = $region5
    $region4: #{tpu_custom_call.1} parent=1 // pred_region
      %s20 = sadd.s32 0, 0
      %s21 = smul.u32 8, %s20
      %p22 = scmp.lt.s32.totalorder %s21, 7
      %s23 = scalar_select %p22, %s21, 7
      %s24 = smul.addr %s23, 4
      %s25 = scalar_lea.vmem %s2, %s24
      %s26 = sadd.s32 0, 0
      %s27 = smul.u32 8, %s26
    $region5: #{tpu_custom_call.1} parent=1 // pred_fallthru
      _
    // Predicated region
    $region6: #{tpu_custom_call.1} parent=1 // pred_check
      _
    $region7: #{tpu_custom_call.1} parent=1 // pred_check_branch
      %29 = sbr.rel (0) target = $region9
    $region8: #{tpu_custom_call.1} parent=1 // pred_region
      %s30 = sadd.s32 0, 0
      %s31 = smul.u32 8, %s30
      %p32 = scmp.lt.s32.totalorder %s31, 7
      %s33 = scalar_select %p32, %s31, 7
      %s34 = smul.addr %s33, 8
      %s35 = scalar_lea.vmem %s3, %s34
      %s36 = sadd.s32 0, 0
      %s37 = smul.u32 8, %s36
    $region9: #{tpu_custom_call.1} parent=1 // pred_fallthru
      _
    // Predicated region
    $region10: #{tpu_custom_call.1} parent=1 // pred_check
      _
    $region11: #{tpu_custom_call.1} parent=1 // pred_check_branch
      %39 = sbr.rel (0) target = $region13
    $region12: #{tpu_custom_call.1} parent=1 // pred_region
      _
    $region13: #{tpu_custom_call.1} parent=1 // pred_fallthru
      _
    // Predicated region
    $region14: #{tpu_custom_call.1} parent=1 // pred_check
      _
    $region15: #{tpu_custom_call.1} parent=1 // pred_check_branch
      %41 = sbr.rel (0) target = $region17
    $region16: #{tpu_custom_call.1} parent=1 // pred_region
      _
    $region17: #{tpu_custom_call.1} parent=1 // pred_fallthru
      _
    // Predicated region
    $region18: #{tpu_custom_call.1} parent=1 // pred_check
      _
    $region19: #{tpu_custom_call.1} parent=1 // pred_check_branch
      %43 = sbr.rel (0) target = $region21
    $region20: #{tpu_custom_call.1} parent=1 // pred_region
      _
    $region21: #{tpu_custom_call.1} parent=1 // pred_fallthru
      _
    // Predicated region
    $region22: #{tpu_custom_call.1} parent=1 // pred_check
      _
    $region23: #{tpu_custom_call.1} parent=1 // pred_check_branch
      %45 = sbr.rel (0) target = $region25
    $region24: #{tpu_custom_call.1} parent=1 // pred_region
      _
    $region25: #{tpu_custom_call.1} parent=1 // pred_fallthru
      _
    // Predicated region
    $region26: #{tpu_custom_call.1} parent=1 // pred_check
      _
    $region27: #{tpu_custom_call.1} parent=1 // pred_check_branch
      %47 = sbr.rel (0) target = $region29
    $region28: #{tpu_custom_call.1} parent=1 // pred_region
      _
    $region29: #{tpu_custom_call.1} parent=1 // pred_fallthru
      _
    // Predicated region
    $region30: #{tpu_custom_call.1} parent=1 // pred_check
      _
    $region31: #{tpu_custom_call.1} parent=1 // pred_check_branch
      %49 = sbr.rel (0) target = $region33
    $region32: #{tpu_custom_call.1} parent=1 // pred_region
      _
    $region33: #{tpu_custom_call.1} parent=1 // pred_fallthru
      _
    %s50 = sadd.s32 0, 0
    %s51 = smul.u32 8, %s50
    %p52 = scmp.lt.s32.totalorder %s51, 7
    %s53 = scalar_select %p52, %s51, 7
    %s54 = smul.addr %s53, 4
    %s55 = scalar_lea.vmem %s2, %s54
    %s56 = sadd.s32 0, 0
    %s57 = smul.u32 8, %s56
    %p58 = scmp.lt.s32.totalorder %s57, 7
    %s59 = scalar_select %p58, %s57, 7
    %s60 = smul.addr %s59, 8
    %s61 = scalar_lea.vmem %s3, %s60
    %s62 = sadd.s32 0, 0
    %s63 = smul.u32 8, %s62
    %p64 = scmp.lt.s32.totalorder %s63, 7
    %s65 = scalar_select %p64, %s63, 7
    %s66 = smul.addr %s65, 4
    %s67 = scalar_lea.vmem %s2, %s66
    %s68 = sadd.s32 0, 0
    %s69 = smul.u32 8, %s68
    %s70 = sadd.s32 0, 0
    %s71 = smul.u32 8, %s70
    %p72 = scmp.lt.s32.totalorder %s71, 7
    %s73 = scalar_select %p72, %s71, 7
    %s74 = smul.addr %s73, 8
    %s75 = scalar_lea.vmem %s3, %s74
    %s76 = sadd.s32 0, 0
    %s77 = smul.u32 8, %s76
    %p79 = scmp.eq.s32.totalorder 0, 0
    // Predicated region
    $region34: #{tpu_custom_call.1} parent=1 // pred_check
      %p80 = pneg %p79
    $region35: #{tpu_custom_call.1} parent=1 // pred_check_branch
      %82 = sbr.rel (%p80) target = $region37
    $region36: #{tpu_custom_call.1} parent=1 // pred_region
      %83 = vst [vmem:[#allocation5] sm:$0x3] -inf
    $region37: #{tpu_custom_call.1} parent=1 // pred_fallthru
      _
    %v84 = vld [vmem:[%s67] sm:$0xf]
    %v85 = vld [vmem:[%s67 + $0x4] sm:$0xf]
    %v86 = vld [vmem:[%s67 + $0x8] sm:$0xf]
    %v87 = vld [vmem:[%s67 + $0xc] sm:$0xf]
    %v88 = vld [vmem:[%s67 + $0x10] sm:$0xf]
    %v89 = vld [vmem:[%s67 + $0x14] sm:$0xf]
    %v90 = vld [vmem:[%s67 + $0x18] sm:$0xf]
    %v91 = vld [vmem:[%s67 + $0x1c] sm:$0xf]
    %v92 = vld [vmem:[%s4] sm:$0xf]
    %v93 = vld [vmem:[%s4 + $0x4] sm:$0xf]
    %v94 = vld [vmem:[%s4 + $0x8] sm:$0x3]
    %v95 = vld [vmem:[%s5] sm:$0x1]
    %v97 = vlaneseq
    %v98 = vshrl.u32 %v97, 7
    %v99 = vsub.s32 0, %v98
    %v100 = vrot.slane %v95, %v99
    %v110 = vunpack.c.l.b16 %v84
    %v111 = vunpack.c.l.b16 %v85
    %v112 = vunpack.c.l.b16 %v86
    %v113 = vunpack.c.l.b16 %v87
    %v114 = vunpack.c.l.b16 %v88
    %v115 = vunpack.c.l.b16 %v89
    %v116 = vunpack.c.l.b16 %v90
    %v117 = vunpack.c.l.b16 %v91
    %v118 = vpack.c.b16 %v111, %v110
    %v119 = vpack.c.b16 %v113, %v112
    %v120 = vpack.c.b16 %v115, %v114
    %v121 = vpack.c.b16 %v117, %v116
    %v125 = vunpack.c.l.b16 %v92
    %v126 = vunpack.c.l.b16 %v93
    %v127 = vunpack.c.l.b16 %v94
    %v128 = vpack.c.b16 %v126, %v125
    %v129 = vpack.c.b16 %v127, %v127
    %vm131 = vcmask 154624
    %v133 = vsel %vm131, %v118, 0
    %v136 = vsel %vm131, %v119, 0
    %v139 = vsel %vm131, %v120, 0
    %v142 = vsel %vm131, %v121, 0
    %vm144 = vcmask 1040384
    %vm145 = vcmask 1041408
    %v146 = vsel %vm144, 4294967295, 65535
    %v147 = vsel %vm145, %v146, 0
    %v149 = vand.u32 %v129, %v147
    %151 = vmatprep.subr.bf16.mxu0 0
    %152 = vmatpush1.bf16.msra.mxu0 %v128
    %153 = vmatprep.subr.bf16.mxu0 0
    %154 = vmatpush1.bf16.msra.mxu0 %v149
    %155 = vmatprep.subr.bf16.mxu0 0
    %156 = vmatpush1.bf16.msra.mxu0 0
    %157 = vmatprep.subr.bf16.mxu0 0
    %158 = vmatpush1.bf16.msra.mxu0 0
    %159 = vmatprep.subr.bf16.mxu0 0
    %160 = vmatpush1.bf16.msra.mxu0 0
    %161 = vmatprep.subr.bf16.mxu0 0
    %162 = vmatpush1.bf16.msra.mxu0 0
    %163 = vmatprep.subr.bf16.mxu0 0
    %164 = vmatpush1.bf16.msra.mxu0 0
    %165 = vmatprep.subr.bf16.mxu0 0
    %166 = vmatpush1.bf16.msra.mxu0 0
    %167 = vmatprep.subr.bf16.mxu0 0
    %168 = vmatpush1.bf16.msra.mxu0 0
    %169 = vmatprep.subr.bf16.mxu0 0
    %170 = vmatpush1.bf16.msra.mxu0 0
    %171 = vmatprep.subr.bf16.mxu0 0
    %172 = vmatpush1.bf16.msra.mxu0 0
    %173 = vmatprep.subr.bf16.mxu0 0
    %174 = vmatpush1.bf16.msra.mxu0 0
    %175 = vmatprep.subr.bf16.mxu0 0
    %176 = vmatpush1.bf16.msra.mxu0 0
    %177 = vmatprep.subr.bf16.mxu0 0
    %178 = vmatpush1.bf16.msra.mxu0 0
    %179 = vmatprep.subr.bf16.mxu0 0
    %180 = vmatpush1.bf16.msra.mxu0 0
    %181 = vmatprep.subr.bf16.mxu0 0
    %182 = vmatpush1.bf16.msra.mxu0 0
    %183 = vmatprep.mubr.bf16.mxu0 0
    %184 = vmatmul.mubr.bf16.gmra.mrb[0].mxu0 %v133
    %v185 = vpop.f32.mrb[0].mxu0
    %v186 = vadd.f32 %v100, %v185
    %v187 = vpop.f32.mrb[0].mxu0
    %v188 = vpop.f32.mrb[0].mxu0
    %v189 = vadd.f32 %v100, %v188
    %v190 = vpop.f32.mrb[0].mxu0
    %191 = vmatprep.mubr.bf16.mxu0 0
    %192 = vmatmul.mubr.bf16.gmra.mrb[0].mxu0 %v136
    %v193 = vpop.f32.mrb[0].mxu0
    %v194 = vadd.f32 %v100, %v193
    %v195 = vpop.f32.mrb[0].mxu0
    %v196 = vpop.f32.mrb[0].mxu0
    %v197 = vadd.f32 %v100, %v196
    %v198 = vpop.f32.mrb[0].mxu0
    %199 = vmatprep.mubr.bf16.mxu0 0
    %200 = vmatmul.mubr.bf16.gmra.mrb[0].mxu0 %v139
    %v201 = vpop.f32.mrb[0].mxu0
    %v202 = vadd.f32 %v100, %v201
    %v203 = vpop.f32.mrb[0].mxu0
    %v204 = vpop.f32.mrb[0].mxu0
    %v205 = vadd.f32 %v100, %v204
    %v206 = vpop.f32.mrb[0].mxu0
    %207 = vmatprep.mubr.bf16.mxu0 0
    %208 = vmatmul.mubr.bf16.gmra.mrb[0].mxu0 %v142
    %v209 = vpop.f32.mrb[0].mxu0
    %v210 = vadd.f32 %v100, %v209
    %v211 = vpop.f32.mrb[0].mxu0
    %v212 = vpop.f32.mrb[0].mxu0
    %v213 = vadd.f32 %v100, %v212
    %v214 = vpop.f32.mrb[0].mxu0
    %215 = vdwg.mxu0
    %v216 = vmax.f32 %v186, 0.0
    %v217 = vmax.f32 %v189, 0.0
    %v218 = vmax.f32 %v194, 0.0
    %v219 = vmax.f32 %v197, 0.0
    %v220 = vmax.f32 %v202, 0.0
    %v221 = vmax.f32 %v205, 0.0
    %v222 = vmax.f32 %v210, 0.0
    %v223 = vmax.f32 %v213, 0.0
    %v224 = vpack.c.bf16 %v217, %v216
    %v225 = vpack.c.bf16 %v219, %v218
    %v226 = vpack.c.bf16 %v221, %v220
    %v227 = vpack.c.bf16 %v223, %v222
    %v228 = vld [vmem:[%s6] sm:$0xf]
    %v229 = vld [vmem:[%s6 + $0x4] sm:$0xf]
    %v230 = vld [vmem:[%s6 + $0x8] sm:$0xf]
    %v231 = vld [vmem:[%s6 + $0xc] sm:$0xf]
    %v232 = vld [vmem:[%s7] sm:$0x1]
    %v234 = vlaneseq
    %v235 = vshrl.u32 %v234, 7
    %v236 = vsub.s32 0, %v235
    %v237 = vrot.slane %v232, %v236
    %v243 = vunpack.c.l.b16 %v228
    %v244 = vunpack.c.l.b16 %v229
    %v245 = vunpack.c.l.b16 %v230
    %v246 = vunpack.c.l.b16 %v231
    %v247 = vpack.c.b16 %v244, %v243
    %v248 = vpack.c.b16 %v246, %v245
    %vm251 = vcmask 261120
    %v253 = vsel %vm251, %v224, 0
    %v256 = vsel %vm251, %v225, 0
    %v259 = vsel %vm251, %v226, 0
    %v262 = vsel %vm251, %v227, 0
    %264 = vmatprep.subr.bf16.mxu0 0
    %265 = vmatpush1.bf16.msra.mxu0 %v247
    %266 = vmatprep.subr.bf16.mxu0 0
    %267 = vmatpush1.bf16.msra.mxu0 %v248
    %268 = vmatprep.subr.bf16.mxu0 0
    %269 = vmatpush1.bf16.msra.mxu0 0
    %270 = vmatprep.subr.bf16.mxu0 0
    %271 = vmatpush1.bf16.msra.mxu0 0
    %272 = vmatprep.subr.bf16.mxu0 0
    %273 = vmatpush1.bf16.msra.mxu0 0
    %274 = vmatprep.subr.bf16.mxu0 0
    %275 = vmatpush1.bf16.msra.mxu0 0
    %276 = vmatprep.subr.bf16.mxu0 0
    %277 = vmatpush1.bf16.msra.mxu0 0
    %278 = vmatprep.subr.bf16.mxu0 0
    %279 = vmatpush1.bf16.msra.mxu0 0
    %280 = vmatprep.subr.bf16.mxu0 0
    %281 = vmatpush1.bf16.msra.mxu0 0
    %282 = vmatprep.subr.bf16.mxu0 0
    %283 = vmatpush1.bf16.msra.mxu0 0
    %284 = vmatprep.subr.bf16.mxu0 0
    %285 = vmatpush1.bf16.msra.mxu0 0
    %286 = vmatprep.subr.bf16.mxu0 0
    %287 = vmatpush1.bf16.msra.mxu0 0
    %288 = vmatprep.subr.bf16.mxu0 0
    %289 = vmatpush1.bf16.msra.mxu0 0
    %290 = vmatprep.subr.bf16.mxu0 0
    %291 = vmatpush1.bf16.msra.mxu0 0
    %292 = vmatprep.subr.bf16.mxu0 0
    %293 = vmatpush1.bf16.msra.mxu0 0
    %294 = vmatprep.subr.bf16.mxu0 0
    %295 = vmatpush1.bf16.msra.mxu0 0
    %296 = vmatprep.mubr.bf16.mxu0 0
    %297 = vmatmul.mubr.bf16.gmra.mrb[0].mxu0 %v253
    %v298 = vpop.f32.mrb[0].mxu0
    %v299 = vadd.f32 %v237, %v298
    %v300 = vpop.f32.mrb[0].mxu0
    %v301 = vpop.f32.mrb[0].mxu0
    %v302 = vadd.f32 %v237, %v301
    %v303 = vpop.f32.mrb[0].mxu0
    %304 = vmatprep.mubr.bf16.mxu0 0
    %305 = vmatmul.mubr.bf16.gmra.mrb[0].mxu0 %v256
    %v306 = vpop.f32.mrb[0].mxu0
    %v307 = vadd.f32 %v237, %v306
    %v308 = vpop.f32.mrb[0].mxu0
    %v309 = vpop.f32.mrb[0].mxu0
    %v310 = vadd.f32 %v237, %v309
    %v311 = vpop.f32.mrb[0].mxu0
    %312 = vmatprep.mubr.bf16.mxu0 0
    %313 = vmatmul.mubr.bf16.gmra.mrb[0].mxu0 %v259
    %v314 = vpop.f32.mrb[0].mxu0
    %v315 = vadd.f32 %v237, %v314
    %v316 = vpop.f32.mrb[0].mxu0
    %v317 = vpop.f32.mrb[0].mxu0
    %v318 = vadd.f32 %v237, %v317
    %v319 = vpop.f32.mrb[0].mxu0
    %320 = vmatprep.mubr.bf16.mxu0 0
    %321 = vmatmul.mubr.bf16.gmra.mrb[0].mxu0 %v262
    %v322 = vpop.f32.mrb[0].mxu0
    %v323 = vadd.f32 %v237, %v322
    %v324 = vpop.f32.mrb[0].mxu0
    %v325 = vpop.f32.mrb[0].mxu0
    %v326 = vadd.f32 %v237, %v325
    %v327 = vpop.f32.mrb[0].mxu0
    %328 = vdwg.mxu0
    %v329 = vmax.f32 %v299, 0.0
    %v330 = vmax.f32 %v302, 0.0
    %v331 = vmax.f32 %v307, 0.0
    %v332 = vmax.f32 %v310, 0.0
    %v333 = vmax.f32 %v315, 0.0
    %v334 = vmax.f32 %v318, 0.0
    %v335 = vmax.f32 %v323, 0.0
    %v336 = vmax.f32 %v326, 0.0
    %v337 = vpack.c.bf16 %v330, %v329
    %v338 = vpack.c.bf16 %v332, %v331
    %v339 = vpack.c.bf16 %v334, %v333
    %v340 = vpack.c.bf16 %v336, %v335
    %v341 = vld [vmem:[%s8] sm:$0xf]
    %v342 = vld [vmem:[%s8 + $0x4] sm:$0xf]
    %v343 = vld [vmem:[%s8 + $0x8] sm:$0xf]
    %v344 = vld [vmem:[%s8 + $0xc] sm:$0xf]
    %v345 = vld [vmem:[%s8 + $0x10] sm:$0xf]
    %v346 = vld [vmem:[%s8 + $0x14] sm:$0xf]
    %v347 = vld [vmem:[%s8 + $0x18] sm:$0xf]
    %v348 = vld [vmem:[%s8 + $0x1c] sm:$0xf]
    %v349 = vld [vmem:[%s9] sm:$0x1]
    %v351 = vlaneseq
    %v352 = vshrl.u32 %v351, 7
    %v353 = vsub.s32 0, %v352
    %v354 = vrot.slane %v349, %v353
    %v364 = vunpack.c.l.b16 %v341
    %v365 = vunpack.c.l.b16 %v342
    %v366 = vunpack.c.l.b16 %v343
    %v367 = vunpack.c.l.b16 %v344
    %v368 = vunpack.c.l.b16 %v345
    %v369 = vunpack.c.l.b16 %v346
    %v370 = vunpack.c.l.b16 %v347
    %v371 = vunpack.c.l.b16 %v348
    %v372 = vpack.c.b16 %v365, %v364
    %v373 = vpack.c.b16 %v367, %v366
    %v374 = vpack.c.b16 %v369, %v368
    %v375 = vpack.c.b16 %v371, %v370
    %vm380 = vcmask 523264
    %v382 = vsel %vm380, %v337, 0
    %v385 = vsel %vm380, %v338, 0
    %v388 = vsel %vm380, %v339, 0
    %v391 = vsel %vm380, %v340, 0
    %393 = vmatprep.subr.bf16.mxu0 0
    %394 = vmatpush1.bf16.msra.mxu0 %v372
    %395 = vmatprep.subr.bf16.mxu0 0
    %396 = vmatpush1.bf16.msra.mxu0 %v373
    %397 = vmatprep.subr.bf16.mxu0 0
    %398 = vmatpush1.bf16.msra.mxu0 %v374
    %399 = vmatprep.subr.bf16.mxu0 0
    %400 = vmatpush1.bf16.msra.mxu0 %v375
    %401 = vmatprep.subr.bf16.mxu0 0
    %402 = vmatpush1.bf16.msra.mxu0 0
    %403 = vmatprep.subr.bf16.mxu0 0
    %404 = vmatpush1.bf16.msra.mxu0 0
    %405 = vmatprep.subr.bf16.mxu0 0
    %406 = vmatpush1.bf16.msra.mxu0 0
    %407 = vmatprep.subr.bf16.mxu0 0
    %408 = vmatpush1.bf16.msra.mxu0 0
    %409 = vmatprep.subr.bf16.mxu0 0
    %410 = vmatpush1.bf16.msra.mxu0 0
    %411 = vmatprep.subr.bf16.mxu0 0
    %412 = vmatpush1.bf16.msra.mxu0 0
    %413 = vmatprep.subr.bf16.mxu0 0
    %414 = vmatpush1.bf16.msra.mxu0 0
    %415 = vmatprep.subr.bf16.mxu0 0
    %416 = vmatpush1.bf16.msra.mxu0 0
    %417 = vmatprep.subr.bf16.mxu0 0
    %418 = vmatpush1.bf16.msra.mxu0 0
    %419 = vmatprep.subr.bf16.mxu0 0
    %420 = vmatpush1.bf16.msra.mxu0 0
    %421 = vmatprep.subr.bf16.mxu0 0
    %422 = vmatpush1.bf16.msra.mxu0 0
    %423 = vmatprep.subr.bf16.mxu0 0
    %424 = vmatpush1.bf16.msra.mxu0 0
    %425 = vmatprep.mubr.bf16.mxu0 0
    %426 = vmatmul.mubr.bf16.gmra.mrb[0].mxu0 %v382
    %v427 = vpop.f32.mrb[0].mxu0
    %v428 = vadd.f32 %v354, %v427
    %v429 = vpop.f32.mrb[0].mxu0
    %v430 = vpop.f32.mrb[0].mxu0
    %v431 = vadd.f32 %v354, %v430
    %v432 = vpop.f32.mrb[0].mxu0
    %433 = vmatprep.mubr.bf16.mxu0 0
    %434 = vmatmul.mubr.bf16.gmra.mrb[0].mxu0 %v385
    %v435 = vpop.f32.mrb[0].mxu0
    %v436 = vadd.f32 %v354, %v435
    %v437 = vpop.f32.mrb[0].mxu0
    %v438 = vpop.f32.mrb[0].mxu0
    %v439 = vadd.f32 %v354, %v438
    %v440 = vpop.f32.mrb[0].mxu0
    %441 = vmatprep.mubr.bf16.mxu0 0
    %442 = vmatmul.mubr.bf16.gmra.mrb[0].mxu0 %v388
    %v443 = vpop.f32.mrb[0].mxu0
    %v444 = vadd.f32 %v354, %v443
    %v445 = vpop.f32.mrb[0].mxu0
    %v446 = vpop.f32.mrb[0].mxu0
    %v447 = vadd.f32 %v354, %v446
    %v448 = vpop.f32.mrb[0].mxu0
    %449 = vmatprep.mubr.bf16.mxu0 0
    %450 = vmatmul.mubr.bf16.gmra.mrb[0].mxu0 %v391
    %v451 = vpop.f32.mrb[0].mxu0
    %v452 = vadd.f32 %v354, %v451
    %v453 = vpop.f32.mrb[0].mxu0
    %v454 = vpop.f32.mrb[0].mxu0
    %v455 = vadd.f32 %v354, %v454
    %v456 = vpop.f32.mrb[0].mxu0
    %457 = vdwg.mxu0
    %s458 = sadd.s32 0, 0
    %s459 = sld [smem:[#allocation3 + %s458]]
    %s460 = sld [smem:[#allocation4 + %s458]]
    %v461 = vld [vmem:[%s75] sm:$0xff]
    %v462 = vld [vmem:[%s75 + $0x8] sm:$0xff]
    %v463 = vld [vmem:[%s75 + $0x10] sm:$0xff]
    %v464 = vld [vmem:[%s75 + $0x18] sm:$0xff]
    %v465 = vld [vmem:[%s75 + $0x20] sm:$0xff]
    %v466 = vld [vmem:[%s75 + $0x28] sm:$0xff]
    %v467 = vld [vmem:[%s75 + $0x30] sm:$0xff]
    %v468 = vld [vmem:[%s75 + $0x38] sm:$0xff]
    %p469 = scmp.le.s32.totalorder %s459, 0
    %p470 = scmp.ge.s32.totalorder %s460, 0
    %p471 = pnand %p469, %p470
    %p472 = pneg %p471
    // Predicated region
    $region38: #{tpu_custom_call.1} parent=1 // pred_check
      _
    $region39: #{tpu_custom_call.1} parent=1 // pred_check_branch
      %474 = sbr.rel (%p471) target = $region41
    $region40: #{tpu_custom_call.1} parent=1 // pred_region
      %vm475 = vcmp.eq.s32.totalorder %v461, 0
      %vm476 = vcmp.eq.s32.totalorder %v462, 0
      %vm477 = vcmp.eq.s32.totalorder %v463, 0
      %vm478 = vcmp.eq.s32.totalorder %v464, 0
      %vm479 = vcmp.eq.s32.totalorder %v465, 0
      %vm480 = vcmp.eq.s32.totalorder %v466, 0
      %vm481 = vcmp.eq.s32.totalorder %v467, 0
      %vm482 = vcmp.eq.s32.totalorder %v468, 0
      %v483 = vsel %vm475, 1, 0
      %v484 = vsel %vm476, 1, 0
      %v485 = vsel %vm477, 1, 0
      %v486 = vsel %vm478, 1, 0
      %v487 = vsel %vm479, 1, 0
      %v488 = vsel %vm480, 1, 0
      %v489 = vsel %vm481, 1, 0
      %v490 = vsel %vm482, 1, 0
      %491 = vset.pattern.permute.xlu0 0
      %492 = vperm.xlu0 %491, %v483
      %v493 = vpop.permute.xlu0 %492
      %494 = vset.pattern.permute.xlu0 0
      %495 = vperm.xlu0 %494, %v484
      %v496 = vpop.permute.xlu0 %495
      %497 = vset.pattern.permute.xlu0 0
      %498 = vperm.xlu0 %497, %v485
      %v499 = vpop.permute.xlu0 %498
      %500 = vset.pattern.permute.xlu0 0
      %501 = vperm.xlu0 %500, %v486
      %v502 = vpop.permute.xlu0 %501
      %503 = vset.pattern.permute.xlu0 0
      %504 = vperm.xlu0 %503, %v487
      %v505 = vpop.permute.xlu0 %504
      %506 = vset.pattern.permute.xlu0 0
      %507 = vperm.xlu0 %506, %v488
      %v508 = vpop.permute.xlu0 %507
      %509 = vset.pattern.permute.xlu0 0
      %510 = vperm.xlu0 %509, %v489
      %v511 = vpop.permute.xlu0 %510
      %512 = vset.pattern.permute.xlu0 0
      %513 = vperm.xlu0 %512, %v490
      %v514 = vpop.permute.xlu0 %513
      %vm515 = vcmp.eq.s32.totalorder %v493, 1
      %vm516 = vcmp.eq.s32.totalorder %v496, 1
      %vm517 = vcmp.eq.s32.totalorder %v499, 1
      %vm518 = vcmp.eq.s32.totalorder %v502, 1
      %vm519 = vcmp.eq.s32.totalorder %v505, 1
      %vm520 = vcmp.eq.s32.totalorder %v508, 1
      %vm521 = vcmp.eq.s32.totalorder %v511, 1
      %vm522 = vcmp.eq.s32.totalorder %v514, 1
      %v523 = vsel %vm515, %v428, -inf
      %v524 = vsel %vm516, %v431, -inf
      %v525 = vsel %vm517, %v436, -inf
      %v526 = vsel %vm518, %v439, -inf
      %v527 = vsel %vm519, %v444, -inf
      %v528 = vsel %vm520, %v447, -inf
      %v529 = vsel %vm521, %v452, -inf
      %v530 = vsel %vm522, %v455, -inf
      %v531 = vmax.f32 %v523, %v527
      %v532 = vmax.f32 %v524, %v528
      %v533 = vmax.f32 %v525, %v529
      %v534 = vmax.f32 %v526, %v530
      %v535 = vmax.f32 %v531, %v532
      %v536 = vmax.f32 %v533, %v534
      %v537 = vmax.f32 %v535, %v536
      %v538 = vrot.slane %v537, 4
      %v539 = vmax.f32 %v537, %v538
      %v540 = vrot.slane %v539, 2
      %v541 = vmax.f32 %v539, %v540
      %v542 = vrot.slane %v541, 1
      %v543 = vmax.f32 %v541, %v542
      %v544 = vld [vmem:[#allocation5] sm:$0x1]
      %v545 = vmax.f32 %v544, %v543
      %546 = vst [vmem:[#allocation5] sm:$0x1] %v545
    $region41: #{tpu_custom_call.1} parent=1 // pred_fallthru
      _
    %p547 = scmp.le.s32.totalorder %s459, 1
    %p548 = scmp.ge.s32.totalorder %s460, 1
    %p549 = pnand %p547, %p548
    %p550 = pneg %p549
    // Predicated region
    $region42: #{tpu_custom_call.1} parent=1 // pred_check
      _
    $region43: #{tpu_custom_call.1} parent=1 // pred_check_branch
      %552 = sbr.rel (%p549) target = $region45
    $region44: #{tpu_custom_call.1} parent=1 // pred_region
      %vm553 = vcmp.eq.s32.totalorder %v461, 1
      %vm554 = vcmp.eq.s32.totalorder %v462, 1
      %vm555 = vcmp.eq.s32.totalorder %v463, 1
      %vm556 = vcmp.eq.s32.totalorder %v464, 1
      %vm557 = vcmp.eq.s32.totalorder %v465, 1
      %vm558 = vcmp.eq.s32.totalorder %v466, 1
      %vm559 = vcmp.eq.s32.totalorder %v467, 1
      %vm560 = vcmp.eq.s32.totalorder %v468, 1
      %v561 = vsel %vm553, 1, 0
      %v562 = vsel %vm554, 1, 0
      %v563 = vsel %vm555, 1, 0
      %v564 = vsel %vm556, 1, 0
      %v565 = vsel %vm557, 1, 0
      %v566 = vsel %vm558, 1, 0
      %v567 = vsel %vm559, 1, 0
      %v568 = vsel %vm560, 1, 0
      %569 = vset.pattern.permute.xlu0 0
      %570 = vperm.xlu0 %569, %v561
      %v571 = vpop.permute.xlu0 %570
      %572 = vset.pattern.permute.xlu0 0
      %573 = vperm.xlu0 %572, %v562
      %v574 = vpop.permute.xlu0 %573
      %575 = vset.pattern.permute.xlu0 0
      %576 = vperm.xlu0 %575, %v563
      %v577 = vpop.permute.xlu0 %576
      %578 = vset.pattern.permute.xlu0 0
      %579 = vperm.xlu0 %578, %v564
      %v580 = vpop.permute.xlu0 %579
      %581 = vset.pattern.permute.xlu0 0
      %582 = vperm.xlu0 %581, %v565
      %v583 = vpop.permute.xlu0 %582
      %584 = vset.pattern.permute.xlu0 0
      %585 = vperm.xlu0 %584, %v566
      %v586 = vpop.permute.xlu0 %585
      %587 = vset.pattern.permute.xlu0 0
      %588 = vperm.xlu0 %587, %v567
      %v589 = vpop.permute.xlu0 %588
      %590 = vset.pattern.permute.xlu0 0
      %591 = vperm.xlu0 %590, %v568
      %v592 = vpop.permute.xlu0 %591
      %vm593 = vcmp.eq.s32.totalorder %v571, 1
      %vm594 = vcmp.eq.s32.totalorder %v574, 1
      %vm595 = vcmp.eq.s32.totalorder %v577, 1
      %vm596 = vcmp.eq.s32.totalorder %v580, 1
      %vm597 = vcmp.eq.s32.totalorder %v583, 1
      %vm598 = vcmp.eq.s32.totalorder %v586, 1
      %vm599 = vcmp.eq.s32.totalorder %v589, 1
      %vm600 = vcmp.eq.s32.totalorder %v592, 1
      %v601 = vsel %vm593, %v428, -inf
      %v602 = vsel %vm594, %v431, -inf
      %v603 = vsel %vm595, %v436, -inf
      %v604 = vsel %vm596, %v439, -inf
      %v605 = vsel %vm597, %v444, -inf
      %v606 = vsel %vm598, %v447, -inf
      %v607 = vsel %vm599, %v452, -inf
      %v608 = vsel %vm600, %v455, -inf
      %v609 = vmax.f32 %v601, %v605
      %v610 = vmax.f32 %v602, %v606
      %v611 = vmax.f32 %v603, %v607
      %v612 = vmax.f32 %v604, %v608
      %v613 = vmax.f32 %v609, %v610
      %v614 = vmax.f32 %v611, %v612
      %v615 = vmax.f32 %v613, %v614
      %v616 = vrot.slane %v615, 4
      %v617 = vmax.f32 %v615, %v616
      %v618 = vrot.slane %v617, 2
      %v619 = vmax.f32 %v617, %v618
      %v620 = vrot.slane %v619, 1
      %v621 = vmax.f32 %v619, %v620
      %v622 = vld [vmem:[#allocation5 + $0x1] sm:$0x1]
      %v623 = vmax.f32 %v622, %v621
      %624 = vst [vmem:[#allocation5 + $0x1] sm:$0x1] %v623
    $region45: #{tpu_custom_call.1} parent=1 // pred_fallthru
      _
    // Predicated region
    $region46: #{tpu_custom_call.1} parent=1 // pred_check
      _
    $region47: #{tpu_custom_call.1} parent=1 // pred_check_branch
      %626 = sbr.rel (0) target = $region49
    $region48: #{tpu_custom_call.1} parent=1 // pred_region
      %s628 = ssub.s32 32, 32
      %629 = vsyncadd [#allocation6], %s628
      %s631 = sshll.u32 [#allocation5], 4
      %s632 = int_to_ptr.vmem [resolvable:$true] %s631
      %634 = dma.vmem_to_hbm [thread:$0]  %s632, 32, %s10, [#allocation6]
    $region49: #{tpu_custom_call.1} parent=1 // pred_fallthru
      _
    // Predicated region
    $region50: #{tpu_custom_call.1} parent=1 // pred_check
      _
    $region51: #{tpu_custom_call.1} parent=1 // pred_check_branch
      %636 = sbr.rel (0) target = $region53
    $region52: #{tpu_custom_call.1} parent=1 // pred_region
      %637 = dma.done [#allocation6], 32
    $region53: #{tpu_custom_call.1} parent=1 // pred_fallthru
      _
    %638 = vsyncpa [#allocation6], 1

</llo_original>
